<compile_context>
chip_gen: v5e
topology: v5e:2x2
jax: 0.10.0
libtpu: 0.0.40
codegen_flags: <defaults>
</compile_context>

<pallas_src>
import jax
import jax.numpy as jnp
from jax.experimental import pallas as pl
from jax.experimental.pallas import tpu as pltpu

LANE = 128     # vreg lane width
SUBLANE = 8    # vreg sublane count (f32)


def _round_up(n, m):
    return ((n + m - 1) // m) * m


def mlp_kernel(x_ref, w1_ref, b1_ref, w2_ref, b2_ref, o_ref):
    # Fused: matmul -> bias -> ReLU -> matmul -> bias, all in one VMEM tile.
    x = x_ref[...]                                                      # [tb, 10]
    h = jnp.dot(x, w1_ref[...], preferred_element_type=jnp.float32)    # [tb, 128]
    h = jnp.maximum(h + b1_ref[...], 0.0)                              # ReLU
    y = jnp.dot(h.astype(w2_ref.dtype), w2_ref[...],
                preferred_element_type=jnp.float32)                    # [tb, 5]
    o_ref[...] = (y + b2_ref[...]).astype(o_ref.dtype)


def prepare_params(w1, b1, w2, b2):
    """One-time (hoisted) lane-padding of the tiny weights/biases.

    w1: [10, 10] -> [10, 128]; b1: [10] -> [1, 128]
    w2: [10, 5]  -> [128, 5];  b2: [5]  -> [1, 5]
    Zero-padded hidden columns/rows do not change the math.
    """
    d_in, d_hid = w1.shape
    d_out = w2.shape[1]
    hid_p = _round_up(d_hid, LANE)
    w1_p = jnp.pad(w1, ((0, 0), (0, hid_p - d_hid)))
    b1_p = jnp.pad(b1.reshape(1, d_hid), ((0, 0), (0, hid_p - d_hid)))
    w2_p = jnp.pad(w2, ((0, hid_p - d_hid), (0, 0)))
    b2_p = b2.reshape(1, d_out)
    return w1_p, b1_p, w2_p, b2_p


def _choose_tb(B, block_b):
    """Pick a batch tile: multiple of 8, capped, and >=2 grid steps if possible."""
    b8 = _round_up(max(B, 1), SUBLANE)
    tb = min(_round_up(block_b, SUBLANE), b8)
    if b8 >= 2 * SUBLANE:
        # Guarantee at least two grid steps so the "parallel" batch axis can
        # span both TensorCores on v7x (free on v5e/v6e).
        half = _round_up((b8 + 1) // 2, SUBLANE)
        tb = min(tb, half)
    return max(SUBLANE, tb)


def toy_model_forward(x, params, *, block_b=8192):
    """x: [B, 10]; params = prepare_params(...); returns [B, 5]."""
    w1_p, b1_p, w2_p, b2_p = params
    B, D_in = x.shape
    assert w1_p.shape[0] == D_in
    HID_P = w1_p.shape[1]
    D_out = w2_p.shape[1]

    # Batch tiling (activations stay feature-unpadded in HBM).
    tb = _choose_tb(B, block_b)
    B_p = _round_up(B, tb)
    x_p = jnp.pad(x, ((0, B_p - B), (0, 0))) if B_p != B else x

    grid = (B_p // tb,)

    itemsize = jnp.dtype(x.dtype).itemsize
    cost = pl.CostEstimate(
        flops=2 * B_p * (D_in * D_in + D_in * D_out),
        transcendentals=0,
        bytes_accessed=B_p * (D_in + D_out) * itemsize
        + int(w1_p.size + b1_p.size + w2_p.size + b2_p.size) * 4,
    )

    out_p = pl.pallas_call(
        mlp_kernel,
        out_shape=jax.ShapeDtypeStruct((B_p, D_out), x.dtype),
        grid=grid,
        in_specs=[
            # Batch-tiled activation stream, feature dim unpadded (full-dim block).
            pl.BlockSpec((tb, D_in), lambda i: (i, 0)),
            # Weights / biases: same block every step -> stay VMEM-resident.
            pl.BlockSpec((D_in, HID_P), lambda i: (0, 0)),
            pl.BlockSpec((1, HID_P), lambda i: (0, 0)),
            pl.BlockSpec((HID_P, D_out), lambda i: (0, 0)),
            pl.BlockSpec((1, D_out), lambda i: (0, 0)),
        ],
        out_specs=pl.BlockSpec((tb, D_out), lambda i: (i, 0)),
        compiler_params=pltpu.CompilerParams(
            dimension_semantics=("parallel",),   # shard batch tiles across TCs (v7x)
            vmem_limit_bytes=32 * 1024 * 1024,   # tb=8192 working set ~16 MiB; fits v5e/v6e/v7x
        ),
        cost_estimate=cost,
    )(x_p, w1_p, b1_p, w2_p, b2_p)

    # Strip batch padding (no feature-dim slicing needed anymore).
    return out_p[:B] if B_p != B else out_p


def init_params(key):
    # Deterministic init mimicking PyTorch nn.Linear default:
    # U(-1/sqrt(fan_in), 1/sqrt(fan_in)) for both weight and bias.
    k1, k2, k3, k4 = jax.random.split(key, 4)
    bound1 = 1.0 / jnp.sqrt(10.0)
    bound2 = 1.0 / jnp.sqrt(10.0)
    w1 = jax.random.uniform(k1, (10, 10), jnp.float32, -bound1, bound1)
    b1 = jax.random.uniform(k2, (10,), jnp.float32, -bound1, bound1)
    w2 = jax.random.uniform(k3, (10, 5), jnp.float32, -bound2, bound2)
    b2 = jax.random.uniform(k4, (5,), jnp.float32, -bound2, bound2)
    return w1, b1, w2, b2


def _reference(x, w1, b1, w2, b2):
    return jnp.maximum(x @ w1 + b1, 0.0) @ w2 + b2


if __name__ == "__main__":
    key = jax.random.PRNGKey(0)
    k_params, k_x1, k_x2 = jax.random.split(key, 3)
    w1, b1, w2, b2 = init_params(k_params)
    params = prepare_params(w1, b1, w2, b2)   # hoisted one-time weight padding

    # Small batch (matches the ToyModel test scale): single grid step.
    B = 8
    x = jax.random.normal(k_x1, (B, 10), jnp.float32)
    out = jax.block_until_ready(toy_model_forward(x, params))
    assert out.shape == (B, 5)
    assert jnp.allclose(out, _reference(x, w1, b1, w2, b2), atol=1e-5, rtol=1e-5)

    # Ragged batch (not a multiple of the tile) with a small batch tile to
    # exercise multi-step pipelining + batch padding/slicing.
    B2 = 200
    x2 = jax.random.normal(k_x2, (B2, 10), jnp.float32)
    out2 = jax.block_until_ready(toy_model_forward(x2, params, block_b=64))
    assert out2.shape == (B2, 5)
    assert jnp.allclose(out2, _reference(x2, w1, b1, w2, b2), atol=1e-5, rtol=1e-5)

    print("KERNEL_OK")
</pallas_src>

<mosaic_0001>
module attributes {stable_mosaic.version = 11 : i64} {
  func.func @mlp_kernel(%arg0: i32, %arg1: memref<8x10xf32, #tpu.memory_space<vmem>>, %arg2: memref<10x128xf32, #tpu.memory_space<vmem>>, %arg3: memref<1x128xf32, #tpu.memory_space<vmem>>, %arg4: memref<128x5xf32, #tpu.memory_space<vmem>>, %arg5: memref<1x5xf32, #tpu.memory_space<vmem>>, %arg6: memref<8x5xf32, #tpu.memory_space<vmem>>) attributes {dimension_semantics = [#tpu.dimension_semantics<parallel>], iteration_bounds = array<i64: 1>, scalar_prefetch = 0 : i64, scratch_operands = 0 : i64, tpu.core_type = #tpu.core_type<tc>, window_params = [{transform_indices = @transform_0, window_bounds = array<i64: 8, 10>}, {pipeline_mode = #tpu.pipeline_mode<synchronous>, transform_indices = @transform_1, window_bounds = array<i64: 10, 128>}, {pipeline_mode = #tpu.pipeline_mode<synchronous>, transform_indices = @transform_2, window_bounds = array<i64: 1, 128>}, {pipeline_mode = #tpu.pipeline_mode<synchronous>, transform_indices = @transform_3, window_bounds = array<i64: 128, 5>}, {pipeline_mode = #tpu.pipeline_mode<synchronous>, transform_indices = @transform_4, window_bounds = array<i64: 1, 5>}, {transform_indices = @transform_5, window_bounds = array<i64: 8, 5>}]} {
    %c0 = arith.constant 0 : index
    %c0_0 = arith.constant 0 : index
    %0 = vector.load %arg1[%c0, %c0_0] : memref<8x10xf32, #tpu.memory_space<vmem>>, vector<8x10xf32>
    %c0_1 = arith.constant 0 : index
    %c0_2 = arith.constant 0 : index
    %1 = vector.load %arg2[%c0_1, %c0_2] : memref<10x128xf32, #tpu.memory_space<vmem>>, vector<10x128xf32>
    %cst = arith.constant dense<0.000000e+00> : vector<8x128xf32>
    %2 = tpu.matmul %0, %1, %cst {dimension_numbers = #tpu.dot_dimension_numbers<[1], [0], [0], [1], [0, 0, 1, 1], [], []>} : vector<8x10xf32>, vector<10x128xf32>, vector<8x128xf32> -> vector<8x128xf32>
    %c0_3 = arith.constant 0 : index
    %c0_4 = arith.constant 0 : index
    %3 = vector.load %arg3[%c0_3, %c0_4] : memref<1x128xf32, #tpu.memory_space<vmem>>, vector<1x128xf32>
    %4 = vector.broadcast %3 : vector<1x128xf32> to vector<8x128xf32>
    %5 = arith.addf %2, %4 : vector<8x128xf32>
    %cst_5 = arith.constant 0.000000e+00 : f32
    %6 = vector.broadcast %cst_5 : f32 to vector<8x128xf32>
    %7 = arith.maximumf %5, %6 : vector<8x128xf32>
    %c0_6 = arith.constant 0 : index
    %c0_7 = arith.constant 0 : index
    %8 = vector.load %arg4[%c0_6, %c0_7] : memref<128x5xf32, #tpu.memory_space<vmem>>, vector<128x5xf32>
    %cst_8 = arith.constant dense<0.000000e+00> : vector<8x5xf32>
    %9 = tpu.matmul %7, %8, %cst_8 {dimension_numbers = #tpu.dot_dimension_numbers<[1], [0], [0], [1], [0, 0, 1, 1], [], []>} : vector<8x128xf32>, vector<128x5xf32>, vector<8x5xf32> -> vector<8x5xf32>
    %c0_9 = arith.constant 0 : index
    %c0_10 = arith.constant 0 : index
    %10 = vector.load %arg5[%c0_9, %c0_10] : memref<1x5xf32, #tpu.memory_space<vmem>>, vector<1x5xf32>
    %11 = vector.broadcast %10 : vector<1x5xf32> to vector<8x5xf32>
    %12 = arith.addf %9, %11 : vector<8x5xf32>
    %c0_11 = arith.constant 0 : index
    %c0_12 = arith.constant 0 : index
    %13 = vector.load %arg6[%c0_11, %c0_12] : memref<8x5xf32, #tpu.memory_space<vmem>>, vector<8x5xf32>
    tpu.vector_store %arg6[%c0_11, %c0_12], %12 {strides = array<i32>} : memref<8x5xf32, #tpu.memory_space<vmem>>, vector<8x5xf32>,
    return
  }
  func.func @transform_0(%arg0: i32) -> (i32, i32) {
    %c0_i32 = arith.constant 0 : i32
    %c0_i32_0 = arith.constant 0 : i32
    return %arg0, %c0_i32 : i32, i32
  }
  func.func @transform_1(%arg0: i32) -> (i32, i32) {
    %c0_i32 = arith.constant 0 : i32
    %c0_i32_0 = arith.constant 0 : i32
    %c0_i32_1 = arith.constant 0 : i32
    return %c0_i32, %c0_i32_0 : i32, i32
  }
  func.func @transform_2(%arg0: i32) -> (i32, i32) {
    %c0_i32 = arith.constant 0 : i32
    %c0_i32_0 = arith.constant 0 : i32
    %c0_i32_1 = arith.constant 0 : i32
    return %c0_i32, %c0_i32_0 : i32, i32
  }
  func.func @transform_3(%arg0: i32) -> (i32, i32) {
    %c0_i32 = arith.constant 0 : i32
    %c0_i32_0 = arith.constant 0 : i32
    %c0_i32_1 = arith.constant 0 : i32
    return %c0_i32, %c0_i32_0 : i32, i32
  }
  func.func @transform_4(%arg0: i32) -> (i32, i32) {
    %c0_i32 = arith.constant 0 : i32
    %c0_i32_0 = arith.constant 0 : i32
    %c0_i32_1 = arith.constant 0 : i32
    return %c0_i32, %c0_i32_0 : i32, i32
  }
  func.func @transform_5(%arg0: i32) -> (i32, i32) {
    %c0_i32 = arith.constant 0 : i32
    %c0_i32_0 = arith.constant 0 : i32
    return %arg0, %c0_i32 : i32, i32
  }
}

</mosaic_0001>

<llo_original>
// kernel: tpu_custom_call.1
$region0: #{tpu_custom_call.1}
  #allocation0 [shape = 'u32[]', space=smem, size = 0x4, offset = 0x4, fixed_abs, tag = 'smem constant byte address 0x4 - core index']
  #allocation1 [shape = 'u32[72,128]{1,0:T(1,128)}', space=vmem, size = 0x9000, scoped, tag = 'internal scratch']
  %s0 = inlined_call_operand.vmem [shape: f32[8,10], index: 0, kind: input, shape index: {}]
  %s1 = inlined_call_operand.vmem [shape: f32[10,128], index: 1, kind: input, shape index: {}]
  %s2 = inlined_call_operand.vmem [shape: f32[1,128], index: 2, kind: input, shape index: {}]
  %s3 = inlined_call_operand.vmem [shape: f32[128,5], index: 3, kind: input, shape index: {}]
  %s4 = inlined_call_operand.vmem [shape: f32[1,5], index: 4, kind: input, shape index: {}]
  %s5 = inlined_call_operand.hbm [shape: f32[8,5], index: 5, kind: output, shape index: {}]
  %s6 = sld [smem:[#allocation0]]
  $region30: #{tpu_custom_call.1} parent=0
    _
  %s8 = ssub.s32 1, %s6
  %s9 = scalar_select 0, %s8, %s6
  $region1: #{tpu_custom_call.1} parent=0
    #allocation2 [shape = 'u8[4096]{0}', space=vmem, size = 0x1000, scoped, tag = 'output window, operand 0, single buffered']
    #allocation3 [shape = 's32[1]{0}', space=sflag, size = 0x4, scoped, tag = 'scoped memory for tpu_custom_call.1']
    %10 = vsyncpa [#allocation3], 0
    // Predicated region
    $region2: #{tpu_custom_call.1} parent=1 // pred_check
      _
    $region3: #{tpu_custom_call.1} parent=1 // pred_check_branch
      %12 = sbr.rel (0) target = $region5
    $region4: #{tpu_custom_call.1} parent=1 // pred_region
      _
    $region5: #{tpu_custom_call.1} parent=1 // pred_fallthru
      _
    // Predicated region
    $region6: #{tpu_custom_call.1} parent=1 // pred_check
      _
    $region7: #{tpu_custom_call.1} parent=1 // pred_check_branch
      %14 = sbr.rel (0) target = $region9
    $region8: #{tpu_custom_call.1} parent=1 // pred_region
      _
    $region9: #{tpu_custom_call.1} parent=1 // pred_fallthru
      _
    // Predicated region
    $region10: #{tpu_custom_call.1} parent=1 // pred_check
      _
    $region11: #{tpu_custom_call.1} parent=1 // pred_check_branch
      %16 = sbr.rel (0) target = $region13
    $region12: #{tpu_custom_call.1} parent=1 // pred_region
      _
    $region13: #{tpu_custom_call.1} parent=1 // pred_fallthru
      _
    // Predicated region
    $region14: #{tpu_custom_call.1} parent=1 // pred_check
      _
    $region15: #{tpu_custom_call.1} parent=1 // pred_check_branch
      %18 = sbr.rel (0) target = $region17
    $region16: #{tpu_custom_call.1} parent=1 // pred_region
      _
    $region17: #{tpu_custom_call.1} parent=1 // pred_fallthru
      _
    // Predicated region
    $region18: #{tpu_custom_call.1} parent=1 // pred_check
      _
    $region19: #{tpu_custom_call.1} parent=1 // pred_check_branch
      %20 = sbr.rel (0) target = $region21
    $region20: #{tpu_custom_call.1} parent=1 // pred_region
      _
    $region21: #{tpu_custom_call.1} parent=1 // pred_fallthru
      _
    %v21 = vld [vmem:[%s0] sm:$0xff]
    %v22 = vld [vmem:[%s1] sm:$0xff]
    %v23 = vld [vmem:[%s1 + $0x8] sm:$0x3]
    %v24 = vld [vmem:[%s2] sm:$0x1]
    %v26 = vperm.slane %v24, 0
    %vm28 = vcmask 80896
    %v30 = vsel %vm28, %v21, 0
    %vm32 = vcmask 1041408
    %v34 = vsel %vm32, %v23, 0
    %36 = vmatpush.msra.mxu0 0.0
    %37 = vmatpush.msra.mxu0 0.0
    %38 = vmatpush.msra.mxu0 0.0
    %39 = vmatpush.msra.mxu0 0.0
    %40 = vmatpush.msra.mxu0 0.0
    %41 = vmatpush.msra.mxu0 0.0
    %42 = vmatpush.msra.mxu0 0.0
    %43 = vmatpush.msra.mxu0 0.0
    %44 = vmatpush.msra.mxu0 0.0
    %45 = vmatpush.msra.mxu0 0.0
    %46 = vmatpush.msra.mxu0 0.0
    %47 = vmatpush.msra.mxu0 0.0
    %48 = vmatpush.msra.mxu0 0.0
    %49 = vmatpush.msra.mxu0 0.0
    %50 = vmatpush.msra.mxu0 %v34
    %51 = vmatpush.msra.mxu0 %v22
    %52 = vmatmul.f32.gmra.mxu0 %v30
    %v53 = vpop.f32.mrf.mxu0
    %v54 = vadd.f32 %v26, %v53
    %55 = vdwg.mxu0
    %v56 = vmax.f32 %v54, 0.0
    %v57 = vld [vmem:[%s3] sm:$0xff]
    %v58 = vld [vmem:[%s3 + $0x8] sm:$0xff]
    %v59 = vld [vmem:[%s3 + $0x10] sm:$0xff]
    %v60 = vld [vmem:[%s3 + $0x18] sm:$0xff]
    %v61 = vld [vmem:[%s3 + $0x20] sm:$0xff]
    %v62 = vld [vmem:[%s3 + $0x28] sm:$0xff]
    %v63 = vld [vmem:[%s3 + $0x30] sm:$0xff]
    %v64 = vld [vmem:[%s3 + $0x38] sm:$0xff]
    %v65 = vld [vmem:[%s3 + $0x40] sm:$0xff]
    %v66 = vld [vmem:[%s3 + $0x48] sm:$0xff]
    %v67 = vld [vmem:[%s3 + $0x50] sm:$0xff]
    %v68 = vld [vmem:[%s3 + $0x58] sm:$0xff]
    %v69 = vld [vmem:[%s3 + $0x60] sm:$0xff]
    %v70 = vld [vmem:[%s3 + $0x68] sm:$0xff]
    %v71 = vld [vmem:[%s3 + $0x70] sm:$0xff]
    %v72 = vld [vmem:[%s3 + $0x78] sm:$0xff]
    %v73 = vld [vmem:[%s4] sm:$0x1]
    %v75 = vperm.slane %v73, 0
    %77 = vmatpush.msra.mxu0 %v72
    %78 = vmatpush.msra.mxu0 %v71
    %79 = vmatpush.msra.mxu0 %v70
    %80 = vmatpush.msra.mxu0 %v69
    %81 = vmatpush.msra.mxu0 %v68
    %82 = vmatpush.msra.mxu0 %v67
    %83 = vmatpush.msra.mxu0 %v66
    %84 = vmatpush.msra.mxu0 %v65
    %85 = vmatpush.msra.mxu0 %v64
    %86 = vmatpush.msra.mxu0 %v63
    %87 = vmatpush.msra.mxu0 %v62
    %88 = vmatpush.msra.mxu0 %v61
    %89 = vmatpush.msra.mxu0 %v60
    %90 = vmatpush.msra.mxu0 %v59
    %91 = vmatpush.msra.mxu0 %v58
    %92 = vmatpush.msra.mxu0 %v57
    %93 = vmatmul.f32.gmra.mxu0 %v56
    %v94 = vpop.f32.mrf.mxu0
    %v95 = vadd.f32 %v75, %v94
    %96 = vdwg.mxu0
    %vm97 = vcmask 39936
    %98 = vst.msk [vmem:[#allocation2] sm:$0xff] %vm97, %v95
    // Predicated region
    $region22: #{tpu_custom_call.1} parent=1 // pred_check
      _
    $region23: #{tpu_custom_call.1} parent=1 // pred_check_branch
      %100 = sbr.rel (0) target = $region25
    $region24: #{tpu_custom_call.1} parent=1 // pred_region
      %102 = vsyncadd [#allocation3], 0
      %s104 = sshll.u32 [#allocation2], 4
      %s105 = int_to_ptr.vmem [resolvable:$true] %s104
      %s106 = sshll.u32 %s5, 4
      %s107 = int_to_ptr.hbm [resolvable:$true] %s106
      %109 = dma.vmem_to_hbm [thread:$0]  %s105, 128, %s107, [#allocation3]
    $region25: #{tpu_custom_call.1} parent=1 // pred_fallthru
      _
    // Predicated region
    $region26: #{tpu_custom_call.1} parent=1 // pred_check
      _
    $region27: #{tpu_custom_call.1} parent=1 // pred_check_branch
      %111 = sbr.rel (0) target = $region29
    $region28: #{tpu_custom_call.1} parent=1 // pred_region
      %113 = dma.done [#allocation3], 128
    $region29: #{tpu_custom_call.1} parent=1 // pred_fallthru
      _
    %114 = vsyncpa [#allocation3], 1

</llo_original>
